<compile_context>
chip_gen: v5e
topology: v5e:2x2
jax: 0.10.0
libtpu: 0.0.40
codegen_flags: <defaults>
</compile_context>

<pallas_src>
import functools

import jax
import jax.numpy as jnp
from jax import lax
from jax.experimental import pallas as pl
from jax.experimental.pallas import tpu as pltpu

STD_COEFF = 0.5
COV_COEFF = 0.5
VAR_EPS = 1e-4
NORM_EPS = 1e-12

# Double-buffered input blocks budgeted at ~20 MiB -> fits v7x 32 MiB scoped default
# (64 MiB physical) with headroom; explicit 32 MiB limit also lifts v5e's 16 MiB default.
_VMEM_BUDGET_BYTES = 20 * 1024 * 1024
_VMEM_LIMIT_BYTES = 32 * 1024 * 1024


def _sublane_pad(n, itemsize):
    mult = 8 * max(1, 4 // max(1, itemsize))   # f32 -> 8, bf16 -> 16, 8-bit -> 32
    return -(-n // mult) * mult


def _pick_tile_d(d, n_agg, x_dtype, a_dtype):
    """Largest lane-aligned feature tile whose double-buffered blocks fit the budget."""
    bx = jnp.dtype(x_dtype).itemsize
    ba = jnp.dtype(a_dtype).itemsize
    rows = _sublane_pad(n_agg, min(bx, ba))
    gram_bytes = 2 * _sublane_pad(n_agg, 4) * max(128, n_agg) * 4  # 2 lane-padded B x B Grams

    def fits(td):
        return 2 * rows * td * (bx + ba) + gram_bytes <= _VMEM_BUDGET_BYTES

    if fits(d):
        return d                      # whole-D single block, grid of 1
    for cand in (8192, 4096, 2048, 1024, 512, 256, 128):
        if cand < d and d % cand == 0 and fits(cand):
            return cand
    # TODO(synk): uneven D with no fitting divisor would need masked edge tiles.
    return d


def _agg_loss_kernel(xs_ref, agg_ref, o_ref,
                     gx_acc, gy_acc, sx_acc, sy_acc,
                     *, n_agg, d_total):
    j = pl.program_id(0)
    nj = pl.num_programs(0)

    @pl.when(j == 0)
    def _init():
        gx_acc[...] = jnp.zeros_like(gx_acc)
        gy_acc[...] = jnp.zeros_like(gy_acc)
        sx_acc[...] = jnp.zeros_like(sx_acc)
        sy_acc[...] = jnp.zeros_like(sy_acc)

    x = xs_ref[...].astype(jnp.float32)                  # (B, tile_d)
    a = agg_ref[...].astype(jnp.float32)                 # (B, tile_d)

    inv_bm1 = 1.0 / (n_agg - 1)

    # --- center x over the batch axis ---
    x_c = x - jnp.mean(x, axis=0, keepdims=True)

    # --- y = F.normalize(agg_out, dim=0): per-column L2 normalization.
    #     max(sqrt(ss), eps) == sqrt(max(ss, eps^2)) -> one rsqrt (EUP) per column.
    ss = jnp.sum(a * a, axis=0, keepdims=True)           # (1, tile_d)
    y = a * lax.rsqrt(jnp.maximum(ss, NORM_EPS * NORM_EPS))

    # --- std terms (unbiased variance over the batch axis) ---
    std_x = jnp.sqrt(jnp.sum(x_c * x_c, axis=0, keepdims=True) * inv_bm1 + VAR_EPS)
    y_c = y - jnp.mean(y, axis=0, keepdims=True)
    std_y = jnp.sqrt(jnp.sum(y_c * y_c, axis=0, keepdims=True) * inv_bm1 + VAR_EPS)
    sx_acc[...] += jnp.sum(jnp.maximum(1.0 - std_x, 0.0))
    sy_acc[...] += jnp.sum(jnp.maximum(1.0 - std_y, 0.0))

    # --- B x B Gram accumulators, contracting the feature axis (K = tile_d) on the MXU ---
    dn = (((1,), (1,)), ((), ()))
    gx_acc[...] += lax.dot_general(x_c, x_c, dn, preferred_element_type=jnp.float32)
    gy_acc[...] += lax.dot_general(y, y, dn, preferred_element_type=jnp.float32)

    @pl.when(j == nj - 1)
    def _finalize():
        std_loss = (sx_acc[0, 0] + sy_acc[0, 0]) * (0.5 / d_total)
        # sum((X_c^T Y)^2) == sum((X_c X_c^T) * (Y Y^T)); fold all scales once.
        cov_loss = jnp.sum(gx_acc[...] * gy_acc[...]) * (inv_bm1 * inv_bm1 / d_total)
        o_ref[0, 0] = STD_COEFF * std_loss + COV_COEFF * cov_loss


def agg_loss(coles_out, agg_out):
    """coles_out: (B*split, D), agg_out: (B, D) -> scalar loss (f32)."""
    n_coles, d = coles_out.shape
    n_agg, d2 = agg_out.shape
    assert d == d2, "feature dims must match"
    assert n_agg >= 2, "unbiased variance / covariance need at least 2 rows"
    assert n_coles % n_agg == 0, "len(coles_out) must be a multiple of len(agg_out)"
    # TODO(synk): PyTorch builds float indices (i * (len/len)); implemented here as
    # the intended integer-stride selection coles_out[::split].
    split = n_coles // n_agg

    # Strided row selection in the wrapper: the kernel then streams exactly the bytes
    # it uses (no split x over-fetch, no split-axis sublane padding, no per-step gather).
    xs = coles_out[::split] if split > 1 else coles_out

    tile_d = _pick_tile_d(d, n_agg, xs.dtype, agg_out.dtype)
    num_tiles = max(1, d // tile_d)

    kernel = functools.partial(_agg_loss_kernel, n_agg=n_agg, d_total=float(d))

    itemsize = jnp.dtype(xs.dtype).itemsize
    cost = pl.CostEstimate(
        flops=int(4 * n_agg * n_agg * d + 12 * n_agg * d),
        transcendentals=int(3 * d),
        bytes_accessed=int(2 * n_agg * d * itemsize + 4),
    )

    out = pl.pallas_call(
        kernel,
        out_shape=jax.ShapeDtypeStruct((1, 1), jnp.float32),
        grid_spec=pltpu.PrefetchScalarGridSpec(
            num_scalar_prefetch=0,
            grid=(num_tiles,),
            in_specs=[
                pl.BlockSpec((n_agg, tile_d), lambda j: (0, j)),
                pl.BlockSpec((n_agg, tile_d), lambda j: (0, j)),
            ],
            out_specs=pl.BlockSpec((1, 1), lambda j: (0, 0),
                                   memory_space=pltpu.MemorySpace.SMEM),
            scratch_shapes=[
                pltpu.VMEM((n_agg, n_agg), jnp.float32),   # Gram(X_c)
                pltpu.VMEM((n_agg, n_agg), jnp.float32),   # Gram(Y)
                pltpu.VMEM((1, 1), jnp.float32),           # sum relu(1-std_x)
                pltpu.VMEM((1, 1), jnp.float32),           # sum relu(1-std_y)
            ],
        ),
        compiler_params=pltpu.CompilerParams(
            dimension_semantics=("arbitrary",),
            vmem_limit_bytes=_VMEM_LIMIT_BYTES,
        ),
        cost_estimate=cost,
    )(xs, agg_out)
    return out[0, 0]


def _agg_loss_ref(coles_out, agg_out):
    """Pure-JAX reference mirroring the PyTorch forward (direct D x D cov)."""
    n_coles, _ = coles_out.shape
    n_agg, _ = agg_out.shape
    split = n_coles // n_agg
    xs = coles_out[::split]
    B, D = xs.shape
    x = xs - xs.mean(axis=0, keepdims=True)
    y = agg_out / jnp.maximum(
        jnp.sqrt(jnp.sum(agg_out * agg_out, axis=0, keepdims=True)), NORM_EPS)
    std_x = jnp.sqrt(jnp.var(x, axis=0, ddof=1) + VAR_EPS)
    std_y = jnp.sqrt(jnp.var(y, axis=0, ddof=1) + VAR_EPS)
    std_loss = (jnp.mean(jnp.maximum(1 - std_x, 0)) / 2
                + jnp.mean(jnp.maximum(1 - std_y, 0)) / 2)
    cov = x.T @ y / (B - 1)
    cov_loss = jnp.sum(cov ** 2) / D
    return STD_COEFF * std_loss + COV_COEFF * cov_loss


if __name__ == "__main__":
    key = jax.random.PRNGKey(0)
    k1, k2 = jax.random.split(key)
    n_agg, split, d = 8, 3, 1024            # agg batch, coles split factor, feature dim
    coles_out = jax.random.normal(k1, (n_agg * split, d), dtype=jnp.float32)
    agg_out = jax.random.normal(k2, (n_agg, d), dtype=jnp.float32)

    loss = jax.block_until_ready(agg_loss(coles_out, agg_out))
    ref = jax.block_until_ready(_agg_loss_ref(coles_out, agg_out))
    # Gram vs direct cov accumulate in different orders -> allow small f32 drift.
    assert jnp.allclose(loss, ref, rtol=1e-4, atol=1e-5), (loss, ref)
    print("KERNEL_OK")
</pallas_src>

<mosaic_0001>
module attributes {stable_mosaic.version = 11 : i64} {
  func.func @_agg_loss_kernel(%arg0: i32, %arg1: memref<8x1024xf32, #tpu.memory_space<vmem>>, %arg2: memref<8x1024xf32, #tpu.memory_space<vmem>>, %arg3: memref<1x1xf32, #tpu.memory_space<smem>>, %arg4: memref<8x8xf32, #tpu.memory_space<vmem>>, %arg5: memref<8x8xf32, #tpu.memory_space<vmem>>, %arg6: memref<1x1xf32, #tpu.memory_space<vmem>>, %arg7: memref<1x1xf32, #tpu.memory_space<vmem>>) attributes {dimension_semantics = [#tpu.dimension_semantics<arbitrary>], iteration_bounds = array<i64: 1>, scalar_prefetch = 0 : i64, scratch_operands = 4 : i64, tpu.core_type = #tpu.core_type<tc>, window_params = [{transform_indices = @transform_0, window_bounds = array<i64: 8, 1024>}, {transform_indices = @transform_1, window_bounds = array<i64: 8, 1024>}, {transform_indices = @transform_2, window_bounds = array<i64: 1, 1>}]} {
    %c0_i32 = arith.constant 0 : i32
    %0 = arith.cmpi eq, %arg0, %c0_i32 : i32
    %1 = arith.extui %0 : i1 to i32
    %c0_i32_0 = arith.constant 0 : i32
    %2 = arith.cmpi ne, %1, %c0_i32_0 : i32
    scf.if %2 {
      %cst_41 = arith.constant 0.000000e+00 : f32
      %76 = vector.broadcast %cst_41 : f32 to vector<8x8xf32>
      %c0_42 = arith.constant 0 : index
      %c0_43 = arith.constant 0 : index
      %77 = vector.load %arg4[%c0_42, %c0_43] : memref<8x8xf32, #tpu.memory_space<vmem>>, vector<8x8xf32>
      tpu.vector_store %arg4[%c0_42, %c0_43], %76 {strides = array<i32>} : memref<8x8xf32, #tpu.memory_space<vmem>>, vector<8x8xf32>,
      %cst_44 = arith.constant 0.000000e+00 : f32
      %78 = vector.broadcast %cst_44 : f32 to vector<8x8xf32>
      %c0_45 = arith.constant 0 : index
      %c0_46 = arith.constant 0 : index
      %79 = vector.load %arg5[%c0_45, %c0_46] : memref<8x8xf32, #tpu.memory_space<vmem>>, vector<8x8xf32>
      tpu.vector_store %arg5[%c0_45, %c0_46], %78 {strides = array<i32>} : memref<8x8xf32, #tpu.memory_space<vmem>>, vector<8x8xf32>,
      %cst_47 = arith.constant 0.000000e+00 : f32
      %80 = vector.broadcast %cst_47 : f32 to vector<1x1xf32>
      %c0_48 = arith.constant 0 : index
      %c0_49 = arith.constant 0 : index
      %81 = vector.load %arg6[%c0_48, %c0_49] : memref<1x1xf32, #tpu.memory_space<vmem>>, vector<1x1xf32>
      tpu.vector_store %arg6[%c0_48, %c0_49], %80 {strides = array<i32>} : memref<1x1xf32, #tpu.memory_space<vmem>>, vector<1x1xf32>,
      %cst_50 = arith.constant 0.000000e+00 : f32
      %82 = vector.broadcast %cst_50 : f32 to vector<1x1xf32>
      %c0_51 = arith.constant 0 : index
      %c0_52 = arith.constant 0 : index
      %83 = vector.load %arg7[%c0_51, %c0_52] : memref<1x1xf32, #tpu.memory_space<vmem>>, vector<1x1xf32>
      tpu.vector_store %arg7[%c0_51, %c0_52], %82 {strides = array<i32>} : memref<1x1xf32, #tpu.memory_space<vmem>>, vector<1x1xf32>,
    } else {
    }
    %c0 = arith.constant 0 : index
    %c0_1 = arith.constant 0 : index
    %3 = vector.load %arg1[%c0, %c0_1] : memref<8x1024xf32, #tpu.memory_space<vmem>>, vector<8x1024xf32>
    %c0_2 = arith.constant 0 : index
    %c0_3 = arith.constant 0 : index
    %4 = vector.load %arg2[%c0_2, %c0_3] : memref<8x1024xf32, #tpu.memory_space<vmem>>, vector<8x1024xf32>
    %cst = arith.constant dense<0.000000e+00> : vector<1024xf32>
    %5 = vector.multi_reduction <add>, %3, %cst [0] : vector<8x1024xf32> to vector<1024xf32>
    %6 = vector.shape_cast %5 : vector<1024xf32> to vector<1x1024xf32>
    %cst_4 = arith.constant 8.000000e+00 : f32
    %7 = vector.broadcast %cst_4 : f32 to vector<1x1024xf32>
    %8 = arith.divf %6, %7 : vector<1x1024xf32>
    %9 = vector.broadcast %8 : vector<1x1024xf32> to vector<8x1024xf32>
    %10 = arith.subf %3, %9 : vector<8x1024xf32>
    %11 = arith.mulf %4, %4 : vector<8x1024xf32>
    %cst_5 = arith.constant dense<0.000000e+00> : vector<1024xf32>
    %12 = vector.multi_reduction <add>, %11, %cst_5 [0] : vector<8x1024xf32> to vector<1024xf32>
    %13 = vector.shape_cast %12 : vector<1024xf32> to vector<1x1024xf32>
    %cst_6 = arith.constant 1.000000e-24 : f32
    %14 = vector.broadcast %cst_6 : f32 to vector<1x1024xf32>
    %15 = arith.maximumf %13, %14 : vector<1x1024xf32>
    %16 = math.rsqrt %15 : vector<1x1024xf32>
    %17 = vector.broadcast %16 : vector<1x1024xf32> to vector<8x1024xf32>
    %18 = arith.mulf %4, %17 : vector<8x1024xf32>
    %19 = arith.mulf %10, %10 : vector<8x1024xf32>
    %cst_7 = arith.constant dense<0.000000e+00> : vector<1024xf32>
    %20 = vector.multi_reduction <add>, %19, %cst_7 [0] : vector<8x1024xf32> to vector<1024xf32>
    %21 = vector.shape_cast %20 : vector<1024xf32> to vector<1x1024xf32>
    %cst_8 = arith.constant 0.142857149 : f32
    %22 = vector.broadcast %cst_8 : f32 to vector<1x1024xf32>
    %23 = arith.mulf %21, %22 : vector<1x1024xf32>
    %cst_9 = arith.constant 9.99999974E-5 : f32
    %24 = vector.broadcast %cst_9 : f32 to vector<1x1024xf32>
    %25 = arith.addf %23, %24 : vector<1x1024xf32>
    %26 = math.sqrt %25 : vector<1x1024xf32>
    %cst_10 = arith.constant dense<0.000000e+00> : vector<1024xf32>
    %27 = vector.multi_reduction <add>, %18, %cst_10 [0] : vector<8x1024xf32> to vector<1024xf32>
    %28 = vector.shape_cast %27 : vector<1024xf32> to vector<1x1024xf32>
    %cst_11 = arith.constant 8.000000e+00 : f32
    %29 = vector.broadcast %cst_11 : f32 to vector<1x1024xf32>
    %30 = arith.divf %28, %29 : vector<1x1024xf32>
    %31 = vector.broadcast %30 : vector<1x1024xf32> to vector<8x1024xf32>
    %32 = arith.subf %18, %31 : vector<8x1024xf32>
    %33 = arith.mulf %32, %32 : vector<8x1024xf32>
    %cst_12 = arith.constant dense<0.000000e+00> : vector<1024xf32>
    %34 = vector.multi_reduction <add>, %33, %cst_12 [0] : vector<8x1024xf32> to vector<1024xf32>
    %35 = vector.shape_cast %34 : vector<1024xf32> to vector<1x1024xf32>
    %cst_13 = arith.constant 0.142857149 : f32
    %36 = vector.broadcast %cst_13 : f32 to vector<1x1024xf32>
    %37 = arith.mulf %35, %36 : vector<1x1024xf32>
    %cst_14 = arith.constant 9.99999974E-5 : f32
    %38 = vector.broadcast %cst_14 : f32 to vector<1x1024xf32>
    %39 = arith.addf %37, %38 : vector<1x1024xf32>
    %40 = math.sqrt %39 : vector<1x1024xf32>
    %c0_15 = arith.constant 0 : index
    %c0_16 = arith.constant 0 : index
    %41 = vector.load %arg6[%c0_15, %c0_16] : memref<1x1xf32, #tpu.memory_space<vmem>>, vector<1x1xf32>
    %cst_17 = arith.constant 1.000000e+00 : f32
    %42 = vector.broadcast %cst_17 : f32 to vector<1x1024xf32>
    %43 = arith.subf %42, %26 : vector<1x1024xf32>
    %cst_18 = arith.constant 0.000000e+00 : f32
    %44 = vector.broadcast %cst_18 : f32 to vector<1x1024xf32>
    %45 = arith.maximumf %43, %44 : vector<1x1024xf32>
    %46 = vector.shape_cast %45 : vector<1x1024xf32> to vector<1x1x1024xf32>
    %cst_19 = arith.constant dense<0.000000e+00> : vector<1xf32>
    %47 = vector.multi_reduction <add>, %46, %cst_19 [1, 2] : vector<1x1x1024xf32> to vector<1xf32>
    %48 = vector.shape_cast %47 : vector<1xf32> to vector<1x1x1xf32>
    %49 = vector.extract %48[0, 0, 0] : f32 from vector<1x1x1xf32>
    %50 = vector.broadcast %49 : f32 to vector<1x1xf32>
    %51 = arith.addf %41, %50 : vector<1x1xf32>
    %c0_20 = arith.constant 0 : index
    %c0_21 = arith.constant 0 : index
    %52 = vector.load %arg6[%c0_20, %c0_21] : memref<1x1xf32, #tpu.memory_space<vmem>>, vector<1x1xf32>
    tpu.vector_store %arg6[%c0_20, %c0_21], %51 {strides = array<i32>} : memref<1x1xf32, #tpu.memory_space<vmem>>, vector<1x1xf32>,
    %c0_22 = arith.constant 0 : index
    %c0_23 = arith.constant 0 : index
    %53 = vector.load %arg7[%c0_22, %c0_23] : memref<1x1xf32, #tpu.memory_space<vmem>>, vector<1x1xf32>
    %cst_24 = arith.constant 1.000000e+00 : f32
    %54 = vector.broadcast %cst_24 : f32 to vector<1x1024xf32>
    %55 = arith.subf %54, %40 : vector<1x1024xf32>
    %cst_25 = arith.constant 0.000000e+00 : f32
    %56 = vector.broadcast %cst_25 : f32 to vector<1x1024xf32>
    %57 = arith.maximumf %55, %56 : vector<1x1024xf32>
    %58 = vector.shape_cast %57 : vector<1x1024xf32> to vector<1x1x1024xf32>
    %cst_26 = arith.constant dense<0.000000e+00> : vector<1xf32>
    %59 = vector.multi_reduction <add>, %58, %cst_26 [1, 2] : vector<1x1x1024xf32> to vector<1xf32>
    %60 = vector.shape_cast %59 : vector<1xf32> to vector<1x1x1xf32>
    %61 = vector.extract %60[0, 0, 0] : f32 from vector<1x1x1xf32>
    %62 = vector.broadcast %61 : f32 to vector<1x1xf32>
    %63 = arith.addf %53, %62 : vector<1x1xf32>
    %c0_27 = arith.constant 0 : index
    %c0_28 = arith.constant 0 : index
    %64 = vector.load %arg7[%c0_27, %c0_28] : memref<1x1xf32, #tpu.memory_space<vmem>>, vector<1x1xf32>
    tpu.vector_store %arg7[%c0_27, %c0_28], %63 {strides = array<i32>} : memref<1x1xf32, #tpu.memory_space<vmem>>, vector<1x1xf32>,
    %c0_29 = arith.constant 0 : index
    %c0_30 = arith.constant 0 : index
    %65 = vector.load %arg4[%c0_29, %c0_30] : memref<8x8xf32, #tpu.memory_space<vmem>>, vector<8x8xf32>
    %cst_31 = arith.constant dense<0.000000e+00> : vector<8x8xf32>
    %66 = tpu.matmul %10, %10, %cst_31 {dimension_numbers = #tpu.dot_dimension_numbers<[1], [1], [0], [0], [0, 0, 1, 0], [], []>} : vector<8x1024xf32>, vector<8x1024xf32>, vector<8x8xf32> -> vector<8x8xf32>
    %67 = arith.addf %65, %66 : vector<8x8xf32>
    %c0_32 = arith.constant 0 : index
    %c0_33 = arith.constant 0 : index
    %68 = vector.load %arg4[%c0_32, %c0_33] : memref<8x8xf32, #tpu.memory_space<vmem>>, vector<8x8xf32>
    tpu.vector_store %arg4[%c0_32, %c0_33], %67 {strides = array<i32>} : memref<8x8xf32, #tpu.memory_space<vmem>>, vector<8x8xf32>,
    %c0_34 = arith.constant 0 : index
    %c0_35 = arith.constant 0 : index
    %69 = vector.load %arg5[%c0_34, %c0_35] : memref<8x8xf32, #tpu.memory_space<vmem>>, vector<8x8xf32>
    %cst_36 = arith.constant dense<0.000000e+00> : vector<8x8xf32>
    %70 = tpu.matmul %18, %18, %cst_36 {dimension_numbers = #tpu.dot_dimension_numbers<[1], [1], [0], [0], [0, 0, 1, 0], [], []>} : vector<8x1024xf32>, vector<8x1024xf32>, vector<8x8xf32> -> vector<8x8xf32>
    %71 = arith.addf %69, %70 : vector<8x8xf32>
    %c0_37 = arith.constant 0 : index
    %c0_38 = arith.constant 0 : index
    %72 = vector.load %arg5[%c0_37, %c0_38] : memref<8x8xf32, #tpu.memory_space<vmem>>, vector<8x8xf32>
    tpu.vector_store %arg5[%c0_37, %c0_38], %71 {strides = array<i32>} : memref<8x8xf32, #tpu.memory_space<vmem>>, vector<8x8xf32>,
    %c0_i32_39 = arith.constant 0 : i32
    %73 = arith.cmpi eq, %arg0, %c0_i32_39 : i32
    %74 = arith.extui %73 : i1 to i32
    %c0_i32_40 = arith.constant 0 : i32
    %75 = arith.cmpi ne, %74, %c0_i32_40 : i32
    scf.if %75 {
      %c0_41 = arith.constant 0 : index
      %c0_42 = arith.constant 0 : index
      %76 = vector.load %arg6[%c0_41, %c0_42] : memref<1x1xf32, #tpu.memory_space<vmem>>, vector<1x1xf32>
      %77 = vector.extract %76[0, 0] : f32 from vector<1x1xf32>
      %c0_43 = arith.constant 0 : index
      %c0_44 = arith.constant 0 : index
      %78 = vector.load %arg7[%c0_43, %c0_44] : memref<1x1xf32, #tpu.memory_space<vmem>>, vector<1x1xf32>
      %79 = vector.extract %78[0, 0] : f32 from vector<1x1xf32>
      %80 = arith.addf %77, %79 : f32
      %cst_45 = arith.constant 4.8828125E-4 : f32
      %81 = arith.mulf %80, %cst_45 : f32
      %c0_46 = arith.constant 0 : index
      %c0_47 = arith.constant 0 : index
      %82 = vector.load %arg4[%c0_46, %c0_47] : memref<8x8xf32, #tpu.memory_space<vmem>>, vector<8x8xf32>
      %c0_48 = arith.constant 0 : index
      %c0_49 = arith.constant 0 : index
      %83 = vector.load %arg5[%c0_48, %c0_49] : memref<8x8xf32, #tpu.memory_space<vmem>>, vector<8x8xf32>
      %84 = arith.mulf %82, %83 : vector<8x8xf32>
      %85 = vector.shape_cast %84 : vector<8x8xf32> to vector<1x8x8xf32>
      %cst_50 = arith.constant dense<0.000000e+00> : vector<1xf32>
      %86 = vector.multi_reduction <add>, %85, %cst_50 [1, 2] : vector<1x8x8xf32> to vector<1xf32>
      %87 = vector.shape_cast %86 : vector<1xf32> to vector<1x1x1xf32>
      %88 = vector.extract %87[0, 0, 0] : f32 from vector<1x1x1xf32>
      %cst_51 = arith.constant 1.99298465E-5 : f32
      %89 = arith.mulf %88, %cst_51 : f32
      %cst_52 = arith.constant 5.000000e-01 : f32
      %90 = arith.mulf %cst_52, %81 : f32
      %cst_53 = arith.constant 5.000000e-01 : f32
      %91 = arith.mulf %cst_53, %89 : f32
      %92 = arith.addf %90, %91 : f32
      %c0_54 = arith.constant 0 : index
      %c0_55 = arith.constant 0 : index
      %93 = memref.load %arg3[%c0_54, %c0_55] : memref<1x1xf32, #tpu.memory_space<smem>>
      memref.store %92, %arg3[%c0_54, %c0_55] : memref<1x1xf32, #tpu.memory_space<smem>>
    } else {
    }
    return
  }
  func.func @transform_0(%arg0: i32) -> (i32, i32) {
    %c0_i32 = arith.constant 0 : i32
    %c0_i32_0 = arith.constant 0 : i32
    return %c0_i32, %arg0 : i32, i32
  }
  func.func @transform_1(%arg0: i32) -> (i32, i32) {
    %c0_i32 = arith.constant 0 : i32
    %c0_i32_0 = arith.constant 0 : i32
    return %c0_i32, %arg0 : i32, i32
  }
  func.func @transform_2(%arg0: i32) -> (i32, i32) {
    %c0_i32 = arith.constant 0 : i32
    %c0_i32_0 = arith.constant 0 : i32
    %c0_i32_1 = arith.constant 0 : i32
    return %c0_i32, %c0_i32_0 : i32, i32
  }
}

</mosaic_0001>

<llo_original>
// kernel: tpu_custom_call.1
$region0: #{tpu_custom_call.1}
  #allocation0 [shape = 'u32[]', space=smem, size = 0x4, offset = 0x4, fixed_abs, tag = 'smem constant byte address 0x4 - core index']
  #allocation1 [shape = 'u32[72,128]{1,0:T(1,128)}', space=vmem, size = 0x9000, scoped, tag = 'internal scratch']
  #allocation2 [shape = 'f32[8,8]{1,0:T(8,128)}', space=vmem, size = 0x1000, scoped, tag = 'scratch operand']
  #allocation3 [shape = 'f32[8,8]{1,0:T(8,128)}', space=vmem, size = 0x1000, scoped, tag = 'scratch operand']
  #allocation4 [shape = 'f32[1,1]{1,0:T(1,128)}', space=vmem, size = 0x200, scoped, tag = 'scratch operand']
  #allocation5 [shape = 'f32[1,1]{1,0:T(1,128)}', space=vmem, size = 0x200, scoped, tag = 'scratch operand']
  %s0 = inlined_call_operand.hbm [shape: f32[8,1024], index: 0, kind: input, shape index: {}]
  %s1 = inlined_call_operand.hbm [shape: f32[8,1024], index: 1, kind: input, shape index: {}]
  %s2 = inlined_call_operand.hbm [shape: f32[1,1], index: 2, kind: output, shape index: {}]
  %s3 = sld [smem:[#allocation0]]
  $region34: #{tpu_custom_call.1} parent=0
    _
  %s5 = ssub.s32 1, %s3
  %s6 = scalar_select 0, %s5, %s3
  $region1: #{tpu_custom_call.1} parent=0
    #allocation6 [shape = 'u8[32768]{0}', space=vmem, size = 0x8000, scoped, tag = 'input window, operand 0, single buffered']
    #allocation7 [shape = 's32[1]{0}', space=sflag, size = 0x4, scoped, tag = 'scoped memory for tpu_custom_call.1']
    #allocation8 [shape = 's32[1]{0}', space=sflag, size = 0x4, scoped, tag = 'scoped memory for tpu_custom_call.1']
    #allocation9 [shape = 'u8[32768]{0}', space=vmem, size = 0x8000, scoped, tag = 'input window, operand 1, single buffered']
    #allocation10 [shape = 's32[1]{0}', space=sflag, size = 0x4, scoped, tag = 'scoped memory for tpu_custom_call.1']
    #allocation11 [shape = 'u8[512]{0}', space=smem, size = 0x200, scoped, tag = 'output window, operand 0, single buffered']
    %7 = vsyncpa [#allocation7], 0
    %8 = vsyncpa [#allocation10], 0
    %9 = vsyncpa [#allocation8], 0
    // Predicated region
    $region2: #{tpu_custom_call.1} parent=1 // pred_check
      _
    $region3: #{tpu_custom_call.1} parent=1 // pred_check_branch
      %11 = sbr.rel (0) target = $region5
    $region4: #{tpu_custom_call.1} parent=1 // pred_region
      %13 = vsyncadd [#allocation7], 0
      %s15 = sshll.u32 %s0, 4
      %s16 = int_to_ptr.hbm [resolvable:$true] %s15
      %s17 = sshll.u32 [#allocation6], 4
      %s18 = int_to_ptr.vmem [resolvable:$true] %s17
      %20 = dma.hbm_to_vmem [thread:$0]  %s16, 1024, %s18, [#allocation7]
    $region5: #{tpu_custom_call.1} parent=1 // pred_fallthru
      _
    // Predicated region
    $region6: #{tpu_custom_call.1} parent=1 // pred_check
      _
    $region7: #{tpu_custom_call.1} parent=1 // pred_check_branch
      %22 = sbr.rel (0) target = $region9
    $region8: #{tpu_custom_call.1} parent=1 // pred_region
      %24 = vsyncadd [#allocation10], 0
      %s26 = sshll.u32 %s1, 4
      %s27 = int_to_ptr.hbm [resolvable:$true] %s26
      %s28 = sshll.u32 [#allocation9], 4
      %s29 = int_to_ptr.vmem [resolvable:$true] %s28
      %31 = dma.hbm_to_vmem [thread:$0]  %s27, 1024, %s29, [#allocation10]
    $region9: #{tpu_custom_call.1} parent=1 // pred_fallthru
      _
    // Predicated region
    $region10: #{tpu_custom_call.1} parent=1 // pred_check
      _
    $region11: #{tpu_custom_call.1} parent=1 // pred_check_branch
      %33 = sbr.rel (0) target = $region13
    $region12: #{tpu_custom_call.1} parent=1 // pred_region
      %35 = dma.done [#allocation7], 1024
    $region13: #{tpu_custom_call.1} parent=1 // pred_fallthru
      _
    // Predicated region
    $region14: #{tpu_custom_call.1} parent=1 // pred_check
      _
    $region15: #{tpu_custom_call.1} parent=1 // pred_check_branch
      %37 = sbr.rel (0) target = $region17
    $region16: #{tpu_custom_call.1} parent=1 // pred_region
      %39 = dma.done [#allocation10], 1024
    $region17: #{tpu_custom_call.1} parent=1 // pred_fallthru
      _
    %p40 = scmp.eq.s32.totalorder 0, 0
    // Predicated region
    $region18: #{tpu_custom_call.1} parent=1 // pred_check
      %p41 = pneg %p40
    $region19: #{tpu_custom_call.1} parent=1 // pred_check_branch
      %43 = sbr.rel (%p41) target = $region21
    $region20: #{tpu_custom_call.1} parent=1 // pred_region
      %vm44 = vcmask 64512
      %45 = vst.msk [vmem:[#allocation2] sm:$0xff] %vm44, 0.0
      %46 = vst.msk [vmem:[#allocation3] sm:$0xff] %vm44, 0.0
      %vm47 = vcmask 0
      %48 = vst.msk [vmem:[#allocation4] sm:$0x1] %vm47, 0.0
      %49 = vst.msk [vmem:[#allocation5] sm:$0x1] %vm47, 0.0
    $region21: #{tpu_custom_call.1} parent=1 // pred_fallthru
      _
    %v50 = vld [vmem:[#allocation6] sm:$0xff]
    %v51 = vld [vmem:[#allocation6 + $0x8] sm:$0xff]
    %v52 = vld [vmem:[#allocation6 + $0x10] sm:$0xff]
    %v53 = vld [vmem:[#allocation6 + $0x18] sm:$0xff]
    %v54 = vld [vmem:[#allocation6 + $0x20] sm:$0xff]
    %v55 = vld [vmem:[#allocation6 + $0x28] sm:$0xff]
    %v56 = vld [vmem:[#allocation6 + $0x30] sm:$0xff]
    %v57 = vld [vmem:[#allocation6 + $0x38] sm:$0xff]
    %v58 = vld [vmem:[#allocation9] sm:$0xff]
    %v59 = vld [vmem:[#allocation9 + $0x8] sm:$0xff]
    %v60 = vld [vmem:[#allocation9 + $0x10] sm:$0xff]
    %v61 = vld [vmem:[#allocation9 + $0x18] sm:$0xff]
    %v62 = vld [vmem:[#allocation9 + $0x20] sm:$0xff]
    %v63 = vld [vmem:[#allocation9 + $0x28] sm:$0xff]
    %v64 = vld [vmem:[#allocation9 + $0x30] sm:$0xff]
    %v65 = vld [vmem:[#allocation9 + $0x38] sm:$0xff]
    %v66 = vrot.slane %v50, 4
    %v67 = vadd.f32 %v50, %v66
    %v68 = vrot.slane %v67, 2
    %v69 = vadd.f32 %v67, %v68
    %v70 = vrot.slane %v69, 1
    %v71 = vadd.f32 %v69, %v70
    %v72 = vrot.slane %v51, 4
    %v73 = vadd.f32 %v51, %v72
    %v74 = vrot.slane %v73, 2
    %v75 = vadd.f32 %v73, %v74
    %v76 = vrot.slane %v75, 1
    %v77 = vadd.f32 %v75, %v76
    %v78 = vrot.slane %v52, 4
    %v79 = vadd.f32 %v52, %v78
    %v80 = vrot.slane %v79, 2
    %v81 = vadd.f32 %v79, %v80
    %v82 = vrot.slane %v81, 1
    %v83 = vadd.f32 %v81, %v82
    %v84 = vrot.slane %v53, 4
    %v85 = vadd.f32 %v53, %v84
    %v86 = vrot.slane %v85, 2
    %v87 = vadd.f32 %v85, %v86
    %v88 = vrot.slane %v87, 1
    %v89 = vadd.f32 %v87, %v88
    %v90 = vrot.slane %v54, 4
    %v91 = vadd.f32 %v54, %v90
    %v92 = vrot.slane %v91, 2
    %v93 = vadd.f32 %v91, %v92
    %v94 = vrot.slane %v93, 1
    %v95 = vadd.f32 %v93, %v94
    %v96 = vrot.slane %v55, 4
    %v97 = vadd.f32 %v55, %v96
    %v98 = vrot.slane %v97, 2
    %v99 = vadd.f32 %v97, %v98
    %v100 = vrot.slane %v99, 1
    %v101 = vadd.f32 %v99, %v100
    %v102 = vrot.slane %v56, 4
    %v103 = vadd.f32 %v56, %v102
    %v104 = vrot.slane %v103, 2
    %v105 = vadd.f32 %v103, %v104
    %v106 = vrot.slane %v105, 1
    %v107 = vadd.f32 %v105, %v106
    %v108 = vrot.slane %v57, 4
    %v109 = vadd.f32 %v57, %v108
    %v110 = vrot.slane %v109, 2
    %v111 = vadd.f32 %v109, %v110
    %v112 = vrot.slane %v111, 1
    %v113 = vadd.f32 %v111, %v112
    %v114 = vrcp.pop 8.0
    %v115 = vmul.f32 8.0, %v114
    %v116 = vsub.f32 1.0, %v115
    %v117 = vmul.f32 %v114, %v116
    %v118 = vadd.f32 %v114, %v117
    %vm119 = vweird.f32 %v114
    %v120 = vsel %vm119, %v114, %v118
    %v121 = vmul.f32 %v71, %v120
    %v122 = vmul.f32 %v77, %v120
    %v123 = vmul.f32 %v83, %v120
    %v124 = vmul.f32 %v89, %v120
    %v125 = vmul.f32 %v95, %v120
    %v126 = vmul.f32 %v101, %v120
    %v127 = vmul.f32 %v107, %v120
    %v128 = vmul.f32 %v113, %v120
    %v129 = vsub.f32 %v50, %v121
    %v130 = vsub.f32 %v51, %v122
    %v131 = vsub.f32 %v52, %v123
    %v132 = vsub.f32 %v53, %v124
    %v133 = vsub.f32 %v54, %v125
    %v134 = vsub.f32 %v55, %v126
    %v135 = vsub.f32 %v56, %v127
    %v136 = vsub.f32 %v57, %v128
    %v137 = vmul.f32 %v58, %v58
    %v138 = vmul.f32 %v59, %v59
    %v139 = vmul.f32 %v60, %v60
    %v140 = vmul.f32 %v61, %v61
    %v141 = vmul.f32 %v62, %v62
    %v142 = vmul.f32 %v63, %v63
    %v143 = vmul.f32 %v64, %v64
    %v144 = vmul.f32 %v65, %v65
    %v145 = vrot.slane %v137, 4
    %v146 = vadd.f32 %v137, %v145
    %v147 = vrot.slane %v146, 2
    %v148 = vadd.f32 %v146, %v147
    %v149 = vrot.slane %v148, 1
    %v150 = vadd.f32 %v148, %v149
    %v151 = vrot.slane %v138, 4
    %v152 = vadd.f32 %v138, %v151
    %v153 = vrot.slane %v152, 2
    %v154 = vadd.f32 %v152, %v153
    %v155 = vrot.slane %v154, 1
    %v156 = vadd.f32 %v154, %v155
    %v157 = vrot.slane %v139, 4
    %v158 = vadd.f32 %v139, %v157
    %v159 = vrot.slane %v158, 2
    %v160 = vadd.f32 %v158, %v159
    %v161 = vrot.slane %v160, 1
    %v162 = vadd.f32 %v160, %v161
    %v163 = vrot.slane %v140, 4
    %v164 = vadd.f32 %v140, %v163
    %v165 = vrot.slane %v164, 2
    %v166 = vadd.f32 %v164, %v165
    %v167 = vrot.slane %v166, 1
    %v168 = vadd.f32 %v166, %v167
    %v169 = vrot.slane %v141, 4
    %v170 = vadd.f32 %v141, %v169
    %v171 = vrot.slane %v170, 2
    %v172 = vadd.f32 %v170, %v171
    %v173 = vrot.slane %v172, 1
    %v174 = vadd.f32 %v172, %v173
    %v175 = vrot.slane %v142, 4
    %v176 = vadd.f32 %v142, %v175
    %v177 = vrot.slane %v176, 2
    %v178 = vadd.f32 %v176, %v177
    %v179 = vrot.slane %v178, 1
    %v180 = vadd.f32 %v178, %v179
    %v181 = vrot.slane %v143, 4
    %v182 = vadd.f32 %v143, %v181
    %v183 = vrot.slane %v182, 2
    %v184 = vadd.f32 %v182, %v183
    %v185 = vrot.slane %v184, 1
    %v186 = vadd.f32 %v184, %v185
    %v187 = vrot.slane %v144, 4
    %v188 = vadd.f32 %v144, %v187
    %v189 = vrot.slane %v188, 2
    %v190 = vadd.f32 %v188, %v189
    %v191 = vrot.slane %v190, 1
    %v192 = vadd.f32 %v190, %v191
    %v193 = vmax.f32 %v150, 1e-24
    %v194 = vmax.f32 %v156, 1e-24
    %v195 = vmax.f32 %v162, 1e-24
    %v196 = vmax.f32 %v168, 1e-24
    %v197 = vmax.f32 %v174, 1e-24
    %v198 = vmax.f32 %v180, 1e-24
    %v199 = vmax.f32 %v186, 1e-24
    %v200 = vmax.f32 %v192, 1e-24
    %v201 = vrsqrt.pop %v193
    %v202 = vmul.f32 %v201, %v193
    %v203 = vmul.f32 %v202, %v201
    %v204 = vmul.f32 0.5, %v203
    %v205 = vsub.f32 1.5, %v204
    %v206 = vmul.f32 %v201, %v205
    %vm207 = vweird.f32 %v193
    %vm208 = vweird.f32 %v201
    %vm209 = vmor %vm207, %vm208
    %v210 = vsel %vm209, %v201, %v206
    %v211 = vrsqrt.pop %v194
    %v212 = vmul.f32 %v211, %v194
    %v213 = vmul.f32 %v212, %v211
    %v214 = vmul.f32 0.5, %v213
    %v215 = vsub.f32 1.5, %v214
    %v216 = vmul.f32 %v211, %v215
    %vm217 = vweird.f32 %v194
    %vm218 = vweird.f32 %v211
    %vm219 = vmor %vm217, %vm218
    %v220 = vsel %vm219, %v211, %v216
    %v221 = vrsqrt.pop %v195
    %v222 = vmul.f32 %v221, %v195
    %v223 = vmul.f32 %v222, %v221
    %v224 = vmul.f32 0.5, %v223
    %v225 = vsub.f32 1.5, %v224
    %v226 = vmul.f32 %v221, %v225
    %vm227 = vweird.f32 %v195
    %vm228 = vweird.f32 %v221
    %vm229 = vmor %vm227, %vm228
    %v230 = vsel %vm229, %v221, %v226
    %v231 = vrsqrt.pop %v196
    %v232 = vmul.f32 %v231, %v196
    %v233 = vmul.f32 %v232, %v231
    %v234 = vmul.f32 0.5, %v233
    %v235 = vsub.f32 1.5, %v234
    %v236 = vmul.f32 %v231, %v235
    %vm237 = vweird.f32 %v196
    %vm238 = vweird.f32 %v231
    %vm239 = vmor %vm237, %vm238
    %v240 = vsel %vm239, %v231, %v236
    %v241 = vrsqrt.pop %v197
    %v242 = vmul.f32 %v241, %v197
    %v243 = vmul.f32 %v242, %v241
    %v244 = vmul.f32 0.5, %v243
    %v245 = vsub.f32 1.5, %v244
    %v246 = vmul.f32 %v241, %v245
    %vm247 = vweird.f32 %v197
    %vm248 = vweird.f32 %v241
    %vm249 = vmor %vm247, %vm248
    %v250 = vsel %vm249, %v241, %v246
    %v251 = vrsqrt.pop %v198
    %v252 = vmul.f32 %v251, %v198
    %v253 = vmul.f32 %v252, %v251
    %v254 = vmul.f32 0.5, %v253
    %v255 = vsub.f32 1.5, %v254
    %v256 = vmul.f32 %v251, %v255
    %vm257 = vweird.f32 %v198
    %vm258 = vweird.f32 %v251
    %vm259 = vmor %vm257, %vm258
    %v260 = vsel %vm259, %v251, %v256
    %v261 = vrsqrt.pop %v199
    %v262 = vmul.f32 %v261, %v199
    %v263 = vmul.f32 %v262, %v261
    %v264 = vmul.f32 0.5, %v263
    %v265 = vsub.f32 1.5, %v264
    %v266 = vmul.f32 %v261, %v265
    %vm267 = vweird.f32 %v199
    %vm268 = vweird.f32 %v261
    %vm269 = vmor %vm267, %vm268
    %v270 = vsel %vm269, %v261, %v266
    %v271 = vrsqrt.pop %v200
    %v272 = vmul.f32 %v271, %v200
    %v273 = vmul.f32 %v272, %v271
    %v274 = vmul.f32 0.5, %v273
    %v275 = vsub.f32 1.5, %v274
    %v276 = vmul.f32 %v271, %v275
    %vm277 = vweird.f32 %v200
    %vm278 = vweird.f32 %v271
    %vm279 = vmor %vm277, %vm278
    %v280 = vsel %vm279, %v271, %v276
    %v281 = vmul.f32 %v58, %v210
    %v282 = vmul.f32 %v59, %v220
    %v283 = vmul.f32 %v60, %v230
    %v284 = vmul.f32 %v61, %v240
    %v285 = vmul.f32 %v62, %v250
    %v286 = vmul.f32 %v63, %v260
    %v287 = vmul.f32 %v64, %v270
    %v288 = vmul.f32 %v65, %v280
    %v289 = vmul.f32 %v129, %v129
    %v290 = vmul.f32 %v130, %v130
    %v291 = vmul.f32 %v131, %v131
    %v292 = vmul.f32 %v132, %v132
    %v293 = vmul.f32 %v133, %v133
    %v294 = vmul.f32 %v134, %v134
    %v295 = vmul.f32 %v135, %v135
    %v296 = vmul.f32 %v136, %v136
    %v297 = vrot.slane %v289, 4
    %v298 = vadd.f32 %v289, %v297
    %v299 = vrot.slane %v298, 2
    %v300 = vadd.f32 %v298, %v299
    %v301 = vrot.slane %v300, 1
    %v302 = vadd.f32 %v300, %v301
    %v303 = vrot.slane %v290, 4
    %v304 = vadd.f32 %v290, %v303
    %v305 = vrot.slane %v304, 2
    %v306 = vadd.f32 %v304, %v305
    %v307 = vrot.slane %v306, 1
    %v308 = vadd.f32 %v306, %v307
    %v309 = vrot.slane %v291, 4
    %v310 = vadd.f32 %v291, %v309
    %v311 = vrot.slane %v310, 2
    %v312 = vadd.f32 %v310, %v311
    %v313 = vrot.slane %v312, 1
    %v314 = vadd.f32 %v312, %v313
    %v315 = vrot.slane %v292, 4
    %v316 = vadd.f32 %v292, %v315
    %v317 = vrot.slane %v316, 2
    %v318 = vadd.f32 %v316, %v317
    %v319 = vrot.slane %v318, 1
    %v320 = vadd.f32 %v318, %v319
    %v321 = vrot.slane %v293, 4
    %v322 = vadd.f32 %v293, %v321
    %v323 = vrot.slane %v322, 2
    %v324 = vadd.f32 %v322, %v323
    %v325 = vrot.slane %v324, 1
    %v326 = vadd.f32 %v324, %v325
    %v327 = vrot.slane %v294, 4
    %v328 = vadd.f32 %v294, %v327
    %v329 = vrot.slane %v328, 2
    %v330 = vadd.f32 %v328, %v329
    %v331 = vrot.slane %v330, 1
    %v332 = vadd.f32 %v330, %v331
    %v333 = vrot.slane %v295, 4
    %v334 = vadd.f32 %v295, %v333
    %v335 = vrot.slane %v334, 2
    %v336 = vadd.f32 %v334, %v335
    %v337 = vrot.slane %v336, 1
    %v338 = vadd.f32 %v336, %v337
    %v339 = vrot.slane %v296, 4
    %v340 = vadd.f32 %v296, %v339
    %v341 = vrot.slane %v340, 2
    %v342 = vadd.f32 %v340, %v341
    %v343 = vrot.slane %v342, 1
    %v344 = vadd.f32 %v342, %v343
    %v345 = vmul.f32 %v302, 0.14285715
    %v346 = vmul.f32 %v308, 0.14285715
    %v347 = vmul.f32 %v314, 0.14285715
    %v348 = vmul.f32 %v320, 0.14285715
    %v349 = vmul.f32 %v326, 0.14285715
    %v350 = vmul.f32 %v332, 0.14285715
    %v351 = vmul.f32 %v338, 0.14285715
    %v352 = vmul.f32 %v344, 0.14285715
    %v353 = vadd.f32 %v345, 0.0001
    %v354 = vadd.f32 %v346, 0.0001
    %v355 = vadd.f32 %v347, 0.0001
    %v356 = vadd.f32 %v348, 0.0001
    %v357 = vadd.f32 %v349, 0.0001
    %v358 = vadd.f32 %v350, 0.0001
    %v359 = vadd.f32 %v351, 0.0001
    %v360 = vadd.f32 %v352, 0.0001
    %v361 = vrsqrt.pop %v353
    %v362 = vmul.f32 %v361, %v353
    %v363 = vmul.f32 %v362, %v361
    %v364 = vmul.f32 0.5, %v363
    %v365 = vsub.f32 1.5, %v364
    %v366 = vmul.f32 %v361, %v365
    %v367 = vmul.f32 %v353, %v366
    %vm368 = vcmp.eq.f32.partialorder %v353, inf
    %v369 = vsel %vm368, %v353, %v367
    %vm370 = vcmp.eq.f32.partialorder %v353, 0.0
    %v371 = vand.u32 %v353, 2147483648
    %v372 = vsel %vm370, %v371, %v369
    %v373 = vrsqrt.pop %v354
    %v374 = vmul.f32 %v373, %v354
    %v375 = vmul.f32 %v374, %v373
    %v376 = vmul.f32 0.5, %v375
    %v377 = vsub.f32 1.5, %v376
    %v378 = vmul.f32 %v373, %v377
    %v379 = vmul.f32 %v354, %v378
    %vm380 = vcmp.eq.f32.partialorder %v354, inf
    %v381 = vsel %vm380, %v354, %v379
    %vm382 = vcmp.eq.f32.partialorder %v354, 0.0
    %v383 = vand.u32 %v354, 2147483648
    %v384 = vsel %vm382, %v383, %v381
    %v385 = vrsqrt.pop %v355
    %v386 = vmul.f32 %v385, %v355
    %v387 = vmul.f32 %v386, %v385
    %v388 = vmul.f32 0.5, %v387
    %v389 = vsub.f32 1.5, %v388
    %v390 = vmul.f32 %v385, %v389
    %v391 = vmul.f32 %v355, %v390
    %vm392 = vcmp.eq.f32.partialorder %v355, inf
    %v393 = vsel %vm392, %v355, %v391
    %vm394 = vcmp.eq.f32.partialorder %v355, 0.0
    %v395 = vand.u32 %v355, 2147483648
    %v396 = vsel %vm394, %v395, %v393
    %v397 = vrsqrt.pop %v356
    %v398 = vmul.f32 %v397, %v356
    %v399 = vmul.f32 %v398, %v397
    %v400 = vmul.f32 0.5, %v399
    %v401 = vsub.f32 1.5, %v400
    %v402 = vmul.f32 %v397, %v401
    %v403 = vmul.f32 %v356, %v402
    %vm404 = vcmp.eq.f32.partialorder %v356, inf
    %v405 = vsel %vm404, %v356, %v403
    %vm406 = vcmp.eq.f32.partialorder %v356, 0.0
    %v407 = vand.u32 %v356, 2147483648
    %v408 = vsel %vm406, %v407, %v405
    %v409 = vrsqrt.pop %v357
    %v410 = vmul.f32 %v409, %v357
    %v411 = vmul.f32 %v410, %v409
    %v412 = vmul.f32 0.5, %v411
    %v413 = vsub.f32 1.5, %v412
    %v414 = vmul.f32 %v409, %v413
    %v415 = vmul.f32 %v357, %v414
    %vm416 = vcmp.eq.f32.partialorder %v357, inf
    %v417 = vsel %vm416, %v357, %v415
    %vm418 = vcmp.eq.f32.partialorder %v357, 0.0
    %v419 = vand.u32 %v357, 2147483648
    %v420 = vsel %vm418, %v419, %v417
    %v421 = vrsqrt.pop %v358
    %v422 = vmul.f32 %v421, %v358
    %v423 = vmul.f32 %v422, %v421
    %v424 = vmul.f32 0.5, %v423
    %v425 = vsub.f32 1.5, %v424
    %v426 = vmul.f32 %v421, %v425
    %v427 = vmul.f32 %v358, %v426
    %vm428 = vcmp.eq.f32.partialorder %v358, inf
    %v429 = vsel %vm428, %v358, %v427
    %vm430 = vcmp.eq.f32.partialorder %v358, 0.0
    %v431 = vand.u32 %v358, 2147483648
    %v432 = vsel %vm430, %v431, %v429
    %v433 = vrsqrt.pop %v359
    %v434 = vmul.f32 %v433, %v359
    %v435 = vmul.f32 %v434, %v433
    %v436 = vmul.f32 0.5, %v435
    %v437 = vsub.f32 1.5, %v436
    %v438 = vmul.f32 %v433, %v437
    %v439 = vmul.f32 %v359, %v438
    %vm440 = vcmp.eq.f32.partialorder %v359, inf
    %v441 = vsel %vm440, %v359, %v439
    %vm442 = vcmp.eq.f32.partialorder %v359, 0.0
    %v443 = vand.u32 %v359, 2147483648
    %v444 = vsel %vm442, %v443, %v441
    %v445 = vrsqrt.pop %v360
    %v446 = vmul.f32 %v445, %v360
    %v447 = vmul.f32 %v446, %v445
    %v448 = vmul.f32 0.5, %v447
    %v449 = vsub.f32 1.5, %v448
    %v450 = vmul.f32 %v445, %v449
    %v451 = vmul.f32 %v360, %v450
    %vm452 = vcmp.eq.f32.partialorder %v360, inf
    %v453 = vsel %vm452, %v360, %v451
    %vm454 = vcmp.eq.f32.partialorder %v360, 0.0
    %v455 = vand.u32 %v360, 2147483648
    %v456 = vsel %vm454, %v455, %v453
    %v457 = vrot.slane %v281, 4
    %v458 = vadd.f32 %v281, %v457
    %v459 = vrot.slane %v458, 2
    %v460 = vadd.f32 %v458, %v459
    %v461 = vrot.slane %v460, 1
    %v462 = vadd.f32 %v460, %v461
    %v463 = vrot.slane %v282, 4
    %v464 = vadd.f32 %v282, %v463
    %v465 = vrot.slane %v464, 2
    %v466 = vadd.f32 %v464, %v465
    %v467 = vrot.slane %v466, 1
    %v468 = vadd.f32 %v466, %v467
    %v469 = vrot.slane %v283, 4
    %v470 = vadd.f32 %v283, %v469
    %v471 = vrot.slane %v470, 2
    %v472 = vadd.f32 %v470, %v471
    %v473 = vrot.slane %v472, 1
    %v474 = vadd.f32 %v472, %v473
    %v475 = vrot.slane %v284, 4
    %v476 = vadd.f32 %v284, %v475
    %v477 = vrot.slane %v476, 2
    %v478 = vadd.f32 %v476, %v477
    %v479 = vrot.slane %v478, 1
    %v480 = vadd.f32 %v478, %v479
    %v481 = vrot.slane %v285, 4
    %v482 = vadd.f32 %v285, %v481
    %v483 = vrot.slane %v482, 2
    %v484 = vadd.f32 %v482, %v483
    %v485 = vrot.slane %v484, 1
    %v486 = vadd.f32 %v484, %v485
    %v487 = vrot.slane %v286, 4
    %v488 = vadd.f32 %v286, %v487
    %v489 = vrot.slane %v488, 2
    %v490 = vadd.f32 %v488, %v489
    %v491 = vrot.slane %v490, 1
    %v492 = vadd.f32 %v490, %v491
    %v493 = vrot.slane %v287, 4
    %v494 = vadd.f32 %v287, %v493
    %v495 = vrot.slane %v494, 2
    %v496 = vadd.f32 %v494, %v495
    %v497 = vrot.slane %v496, 1
    %v498 = vadd.f32 %v496, %v497
    %v499 = vrot.slane %v288, 4
    %v500 = vadd.f32 %v288, %v499
    %v501 = vrot.slane %v500, 2
    %v502 = vadd.f32 %v500, %v501
    %v503 = vrot.slane %v502, 1
    %v504 = vadd.f32 %v502, %v503
    %v505 = vmul.f32 %v462, %v120
    %v506 = vmul.f32 %v468, %v120
    %v507 = vmul.f32 %v474, %v120
    %v508 = vmul.f32 %v480, %v120
    %v509 = vmul.f32 %v486, %v120
    %v510 = vmul.f32 %v492, %v120
    %v511 = vmul.f32 %v498, %v120
    %v512 = vmul.f32 %v504, %v120
    %v513 = vsub.f32 %v281, %v505
    %v514 = vsub.f32 %v282, %v506
    %v515 = vsub.f32 %v283, %v507
    %v516 = vsub.f32 %v284, %v508
    %v517 = vsub.f32 %v285, %v509
    %v518 = vsub.f32 %v286, %v510
    %v519 = vsub.f32 %v287, %v511
    %v520 = vsub.f32 %v288, %v512
    %v521 = vmul.f32 %v513, %v513
    %v522 = vmul.f32 %v514, %v514
    %v523 = vmul.f32 %v515, %v515
    %v524 = vmul.f32 %v516, %v516
    %v525 = vmul.f32 %v517, %v517
    %v526 = vmul.f32 %v518, %v518
    %v527 = vmul.f32 %v519, %v519
    %v528 = vmul.f32 %v520, %v520
    %v529 = vrot.slane %v521, 4
    %v530 = vadd.f32 %v521, %v529
    %v531 = vrot.slane %v530, 2
    %v532 = vadd.f32 %v530, %v531
    %v533 = vrot.slane %v532, 1
    %v534 = vadd.f32 %v532, %v533
    %v535 = vrot.slane %v522, 4
    %v536 = vadd.f32 %v522, %v535
    %v537 = vrot.slane %v536, 2
    %v538 = vadd.f32 %v536, %v537
    %v539 = vrot.slane %v538, 1
    %v540 = vadd.f32 %v538, %v539
    %v541 = vrot.slane %v523, 4
    %v542 = vadd.f32 %v523, %v541
    %v543 = vrot.slane %v542, 2
    %v544 = vadd.f32 %v542, %v543
    %v545 = vrot.slane %v544, 1
    %v546 = vadd.f32 %v544, %v545
    %v547 = vrot.slane %v524, 4
    %v548 = vadd.f32 %v524, %v547
    %v549 = vrot.slane %v548, 2
    %v550 = vadd.f32 %v548, %v549
    %v551 = vrot.slane %v550, 1
    %v552 = vadd.f32 %v550, %v551
    %v553 = vrot.slane %v525, 4
    %v554 = vadd.f32 %v525, %v553
    %v555 = vrot.slane %v554, 2
    %v556 = vadd.f32 %v554, %v555
    %v557 = vrot.slane %v556, 1
    %v558 = vadd.f32 %v556, %v557
    %v559 = vrot.slane %v526, 4
    %v560 = vadd.f32 %v526, %v559
    %v561 = vrot.slane %v560, 2
    %v562 = vadd.f32 %v560, %v561
    %v563 = vrot.slane %v562, 1
    %v564 = vadd.f32 %v562, %v563
    %v565 = vrot.slane %v527, 4
    %v566 = vadd.f32 %v527, %v565
    %v567 = vrot.slane %v566, 2
    %v568 = vadd.f32 %v566, %v567
    %v569 = vrot.slane %v568, 1
    %v570 = vadd.f32 %v568, %v569
    %v571 = vrot.slane %v528, 4
    %v572 = vadd.f32 %v528, %v571
    %v573 = vrot.slane %v572, 2
    %v574 = vadd.f32 %v572, %v573
    %v575 = vrot.slane %v574, 1
    %v576 = vadd.f32 %v574, %v575
    %v577 = vmul.f32 %v534, 0.14285715
    %v578 = vmul.f32 %v540, 0.14285715
    %v579 = vmul.f32 %v546, 0.14285715
    %v580 = vmul.f32 %v552, 0.14285715
    %v581 = vmul.f32 %v558, 0.14285715
    %v582 = vmul.f32 %v564, 0.14285715
    %v583 = vmul.f32 %v570, 0.14285715
    %v584 = vmul.f32 %v576, 0.14285715
    %v585 = vadd.f32 %v577, 0.0001
    %v586 = vadd.f32 %v578, 0.0001
    %v587 = vadd.f32 %v579, 0.0001
    %v588 = vadd.f32 %v580, 0.0001
    %v589 = vadd.f32 %v581, 0.0001
    %v590 = vadd.f32 %v582, 0.0001
    %v591 = vadd.f32 %v583, 0.0001
    %v592 = vadd.f32 %v584, 0.0001
    %v593 = vrsqrt.pop %v585
    %v594 = vmul.f32 %v593, %v585
    %v595 = vmul.f32 %v594, %v593
    %v596 = vmul.f32 0.5, %v595
    %v597 = vsub.f32 1.5, %v596
    %v598 = vmul.f32 %v593, %v597
    %v599 = vmul.f32 %v585, %v598
    %vm600 = vcmp.eq.f32.partialorder %v585, inf
    %v601 = vsel %vm600, %v585, %v599
    %vm602 = vcmp.eq.f32.partialorder %v585, 0.0
    %v603 = vand.u32 %v585, 2147483648
    %v604 = vsel %vm602, %v603, %v601
    %v605 = vrsqrt.pop %v586
    %v606 = vmul.f32 %v605, %v586
    %v607 = vmul.f32 %v606, %v605
    %v608 = vmul.f32 0.5, %v607
    %v609 = vsub.f32 1.5, %v608
    %v610 = vmul.f32 %v605, %v609
    %v611 = vmul.f32 %v586, %v610
    %vm612 = vcmp.eq.f32.partialorder %v586, inf
    %v613 = vsel %vm612, %v586, %v611
    %vm614 = vcmp.eq.f32.partialorder %v586, 0.0
    %v615 = vand.u32 %v586, 2147483648
    %v616 = vsel %vm614, %v615, %v613
    %v617 = vrsqrt.pop %v587
    %v618 = vmul.f32 %v617, %v587
    %v619 = vmul.f32 %v618, %v617
    %v620 = vmul.f32 0.5, %v619
    %v621 = vsub.f32 1.5, %v620
    %v622 = vmul.f32 %v617, %v621
    %v623 = vmul.f32 %v587, %v622
    %vm624 = vcmp.eq.f32.partialorder %v587, inf
    %v625 = vsel %vm624, %v587, %v623
    %vm626 = vcmp.eq.f32.partialorder %v587, 0.0
    %v627 = vand.u32 %v587, 2147483648
    %v628 = vsel %vm626, %v627, %v625
    %v629 = vrsqrt.pop %v588
    %v630 = vmul.f32 %v629, %v588
    %v631 = vmul.f32 %v630, %v629
    %v632 = vmul.f32 0.5, %v631
    %v633 = vsub.f32 1.5, %v632
    %v634 = vmul.f32 %v629, %v633
    %v635 = vmul.f32 %v588, %v634
    %vm636 = vcmp.eq.f32.partialorder %v588, inf
    %v637 = vsel %vm636, %v588, %v635
    %vm638 = vcmp.eq.f32.partialorder %v588, 0.0
    %v639 = vand.u32 %v588, 2147483648
    %v640 = vsel %vm638, %v639, %v637
    %v641 = vrsqrt.pop %v589
    %v642 = vmul.f32 %v641, %v589
    %v643 = vmul.f32 %v642, %v641
    %v644 = vmul.f32 0.5, %v643
    %v645 = vsub.f32 1.5, %v644
    %v646 = vmul.f32 %v641, %v645
    %v647 = vmul.f32 %v589, %v646
    %vm648 = vcmp.eq.f32.partialorder %v589, inf
    %v649 = vsel %vm648, %v589, %v647
    %vm650 = vcmp.eq.f32.partialorder %v589, 0.0
    %v651 = vand.u32 %v589, 2147483648
    %v652 = vsel %vm650, %v651, %v649
    %v653 = vrsqrt.pop %v590
    %v654 = vmul.f32 %v653, %v590
    %v655 = vmul.f32 %v654, %v653
    %v656 = vmul.f32 0.5, %v655
    %v657 = vsub.f32 1.5, %v656
    %v658 = vmul.f32 %v653, %v657
    %v659 = vmul.f32 %v590, %v658
    %vm660 = vcmp.eq.f32.partialorder %v590, inf
    %v661 = vsel %vm660, %v590, %v659
    %vm662 = vcmp.eq.f32.partialorder %v590, 0.0
    %v663 = vand.u32 %v590, 2147483648
    %v664 = vsel %vm662, %v663, %v661
    %v665 = vrsqrt.pop %v591
    %v666 = vmul.f32 %v665, %v591
    %v667 = vmul.f32 %v666, %v665
    %v668 = vmul.f32 0.5, %v667
    %v669 = vsub.f32 1.5, %v668
    %v670 = vmul.f32 %v665, %v669
    %v671 = vmul.f32 %v591, %v670
    %vm672 = vcmp.eq.f32.partialorder %v591, inf
    %v673 = vsel %vm672, %v591, %v671
    %vm674 = vcmp.eq.f32.partialorder %v591, 0.0
    %v675 = vand.u32 %v591, 2147483648
    %v676 = vsel %vm674, %v675, %v673
    %v677 = vrsqrt.pop %v592
    %v678 = vmul.f32 %v677, %v592
    %v679 = vmul.f32 %v678, %v677
    %v680 = vmul.f32 0.5, %v679
    %v681 = vsub.f32 1.5, %v680
    %v682 = vmul.f32 %v677, %v681
    %v683 = vmul.f32 %v592, %v682
    %vm684 = vcmp.eq.f32.partialorder %v592, inf
    %v685 = vsel %vm684, %v592, %v683
    %vm686 = vcmp.eq.f32.partialorder %v592, 0.0
    %v687 = vand.u32 %v592, 2147483648
    %v688 = vsel %vm686, %v687, %v685
    %v689 = vld [vmem:[#allocation4] sm:$0x1]
    %v690 = vsub.f32 1.0, %v372
    %v691 = vsub.f32 1.0, %v384
    %v692 = vsub.f32 1.0, %v396
    %v693 = vsub.f32 1.0, %v408
    %v694 = vsub.f32 1.0, %v420
    %v695 = vsub.f32 1.0, %v432
    %v696 = vsub.f32 1.0, %v444
    %v697 = vsub.f32 1.0, %v456
    %v698 = vmax.f32 %v690, 0.0
    %v699 = vmax.f32 %v691, 0.0
    %v700 = vmax.f32 %v692, 0.0
    %v701 = vmax.f32 %v693, 0.0
    %v702 = vmax.f32 %v694, 0.0
    %v703 = vmax.f32 %v695, 0.0
    %v704 = vmax.f32 %v696, 0.0
    %v705 = vmax.f32 %v697, 0.0
    %vm706 = vcmask 1040384
    %v707 = vsel %vm706, %v698, 0.0
    %v708 = vsel %vm706, %v699, 0.0
    %v709 = vadd.f32 %v707, %v708
    %v710 = vsel %vm706, %v700, 0.0
    %v711 = vadd.f32 %v709, %v710
    %v712 = vsel %vm706, %v701, 0.0
    %v713 = vadd.f32 %v711, %v712
    %v714 = vsel %vm706, %v702, 0.0
    %v715 = vadd.f32 %v713, %v714
    %v716 = vsel %vm706, %v703, 0.0
    %v717 = vadd.f32 %v715, %v716
    %v718 = vsel %vm706, %v704, 0.0
    %v719 = vadd.f32 %v717, %v718
    %v720 = vsel %vm706, %v705, 0.0
    %v721 = vadd.f32 %v719, %v720
    %722 = vadd.xlane.f32.xlu0 %v721
    %v723 = vpop.xlane.xlu0 %722
    %v724 = vrot.slane %v723, 4
    %v725 = vadd.f32 %v723, %v724
    %v726 = vrot.slane %v725, 2
    %v727 = vadd.f32 %v725, %v726
    %v728 = vrot.slane %v727, 1
    %v729 = vadd.f32 %v727, %v728
    %s730 = vtos %v729
    %v731 = vstv %s730
    %v732 = vadd.f32 %v689, %v731
    %vm733 = vcmask 0
    %734 = vst.msk [vmem:[#allocation4] sm:$0x1] %vm733, %v732
    %v735 = vld [vmem:[#allocation5] sm:$0x1]
    %v736 = vsub.f32 1.0, %v604
    %v737 = vsub.f32 1.0, %v616
    %v738 = vsub.f32 1.0, %v628
    %v739 = vsub.f32 1.0, %v640
    %v740 = vsub.f32 1.0, %v652
    %v741 = vsub.f32 1.0, %v664
    %v742 = vsub.f32 1.0, %v676
    %v743 = vsub.f32 1.0, %v688
    %v744 = vmax.f32 %v736, 0.0
    %v745 = vmax.f32 %v737, 0.0
    %v746 = vmax.f32 %v738, 0.0
    %v747 = vmax.f32 %v739, 0.0
    %v748 = vmax.f32 %v740, 0.0
    %v749 = vmax.f32 %v741, 0.0
    %v750 = vmax.f32 %v742, 0.0
    %v751 = vmax.f32 %v743, 0.0
    %v752 = vsel %vm706, %v744, 0.0
    %v753 = vsel %vm706, %v745, 0.0
    %v754 = vadd.f32 %v752, %v753
    %v755 = vsel %vm706, %v746, 0.0
    %v756 = vadd.f32 %v754, %v755
    %v757 = vsel %vm706, %v747, 0.0
    %v758 = vadd.f32 %v756, %v757
    %v759 = vsel %vm706, %v748, 0.0
    %v760 = vadd.f32 %v758, %v759
    %v761 = vsel %vm706, %v749, 0.0
    %v762 = vadd.f32 %v760, %v761
    %v763 = vsel %vm706, %v750, 0.0
    %v764 = vadd.f32 %v762, %v763
    %v765 = vsel %vm706, %v751, 0.0
    %v766 = vadd.f32 %v764, %v765
    %767 = vadd.xlane.f32.xlu0 %v766
    %v768 = vpop.xlane.xlu0 %767
    %v769 = vrot.slane %v768, 4
    %v770 = vadd.f32 %v768, %v769
    %v771 = vrot.slane %v770, 2
    %v772 = vadd.f32 %v770, %v771
    %v773 = vrot.slane %v772, 1
    %v774 = vadd.f32 %v772, %v773
    %s775 = vtos %v774
    %v776 = vstv %s775
    %v777 = vadd.f32 %v735, %v776
    %778 = vst.msk [vmem:[#allocation5] sm:$0x1] %vm733, %v777
    %v779 = vld [vmem:[#allocation2] sm:$0xff]
    %780 = vmatpush.xpose.msra.mxu0 0.0
    %781 = vmatpush.xpose.msra.mxu0 0.0
    %782 = vmatpush.xpose.msra.mxu0 0.0
    %783 = vmatpush.xpose.msra.mxu0 0.0
    %784 = vmatpush.xpose.msra.mxu0 0.0
    %785 = vmatpush.xpose.msra.mxu0 0.0
    %786 = vmatpush.xpose.msra.mxu0 0.0
    %787 = vmatpush.xpose.msra.mxu0 0.0
    %788 = vmatpush.xpose.msra.mxu0 0.0
    %789 = vmatpush.xpose.msra.mxu0 0.0
    %790 = vmatpush.xpose.msra.mxu0 0.0
    %791 = vmatpush.xpose.msra.mxu0 0.0
    %792 = vmatpush.xpose.msra.mxu0 0.0
    %793 = vmatpush.xpose.msra.mxu0 0.0
    %794 = vmatpush.xpose.msra.mxu0 0.0
    %795 = vmatpush.xpose.msra.mxu0 %v129
    %796 = vmatmul.f32.gmra.mxu0 %v129
    %v797 = vpop.f32.mrf.mxu0
    %v798 = vadd.f32 0.0, %v797
    %799 = vdwg.mxu0
    %800 = vmatpush.xpose.msra.mxu0 0.0
    %801 = vmatpush.xpose.msra.mxu0 0.0
    %802 = vmatpush.xpose.msra.mxu0 0.0
    %803 = vmatpush.xpose.msra.mxu0 0.0
    %804 = vmatpush.xpose.msra.mxu0 0.0
    %805 = vmatpush.xpose.msra.mxu0 0.0
    %806 = vmatpush.xpose.msra.mxu0 0.0
    %807 = vmatpush.xpose.msra.mxu0 0.0
    %808 = vmatpush.xpose.msra.mxu0 0.0
    %809 = vmatpush.xpose.msra.mxu0 0.0
    %810 = vmatpush.xpose.msra.mxu0 0.0
    %811 = vmatpush.xpose.msra.mxu0 0.0
    %812 = vmatpush.xpose.msra.mxu0 0.0
    %813 = vmatpush.xpose.msra.mxu0 0.0
    %814 = vmatpush.xpose.msra.mxu0 0.0
    %815 = vmatpush.xpose.msra.mxu0 %v130
    %816 = vmatmul.f32.gmra.mxu0 %v130
    %v817 = vpop.f32.mrf.mxu0
    %v818 = vadd.f32 %v798, %v817
    %819 = vdwg.mxu0
    %820 = vmatpush.xpose.msra.mxu0 0.0
    %821 = vmatpush.xpose.msra.mxu0 0.0
    %822 = vmatpush.xpose.msra.mxu0 0.0
    %823 = vmatpush.xpose.msra.mxu0 0.0
    %824 = vmatpush.xpose.msra.mxu0 0.0
    %825 = vmatpush.xpose.msra.mxu0 0.0
    %826 = vmatpush.xpose.msra.mxu0 0.0
    %827 = vmatpush.xpose.msra.mxu0 0.0
    %828 = vmatpush.xpose.msra.mxu0 0.0
    %829 = vmatpush.xpose.msra.mxu0 0.0
    %830 = vmatpush.xpose.msra.mxu0 0.0
    %831 = vmatpush.xpose.msra.mxu0 0.0
    %832 = vmatpush.xpose.msra.mxu0 0.0
    %833 = vmatpush.xpose.msra.mxu0 0.0
    %834 = vmatpush.xpose.msra.mxu0 0.0
    %835 = vmatpush.xpose.msra.mxu0 %v131
    %836 = vmatmul.f32.gmra.mxu0 %v131
    %v837 = vpop.f32.mrf.mxu0
    %v838 = vadd.f32 %v818, %v837
    %839 = vdwg.mxu0
    %840 = vmatpush.xpose.msra.mxu0 0.0
    %841 = vmatpush.xpose.msra.mxu0 0.0
    %842 = vmatpush.xpose.msra.mxu0 0.0
    %843 = vmatpush.xpose.msra.mxu0 0.0
    %844 = vmatpush.xpose.msra.mxu0 0.0
    %845 = vmatpush.xpose.msra.mxu0 0.0
    %846 = vmatpush.xpose.msra.mxu0 0.0
    %847 = vmatpush.xpose.msra.mxu0 0.0
    %848 = vmatpush.xpose.msra.mxu0 0.0
    %849 = vmatpush.xpose.msra.mxu0 0.0
    %850 = vmatpush.xpose.msra.mxu0 0.0
    %851 = vmatpush.xpose.msra.mxu0 0.0
    %852 = vmatpush.xpose.msra.mxu0 0.0
    %853 = vmatpush.xpose.msra.mxu0 0.0
    %854 = vmatpush.xpose.msra.mxu0 0.0
    %855 = vmatpush.xpose.msra.mxu0 %v132
    %856 = vmatmul.f32.gmra.mxu0 %v132
    %v857 = vpop.f32.mrf.mxu0
    %v858 = vadd.f32 %v838, %v857
    %859 = vdwg.mxu0
    %860 = vmatpush.xpose.msra.mxu0 0.0
    %861 = vmatpush.xpose.msra.mxu0 0.0
    %862 = vmatpush.xpose.msra.mxu0 0.0
    %863 = vmatpush.xpose.msra.mxu0 0.0
    %864 = vmatpush.xpose.msra.mxu0 0.0
    %865 = vmatpush.xpose.msra.mxu0 0.0
    %866 = vmatpush.xpose.msra.mxu0 0.0
    %867 = vmatpush.xpose.msra.mxu0 0.0
    %868 = vmatpush.xpose.msra.mxu0 0.0
    %869 = vmatpush.xpose.msra.mxu0 0.0
    %870 = vmatpush.xpose.msra.mxu0 0.0
    %871 = vmatpush.xpose.msra.mxu0 0.0
    %872 = vmatpush.xpose.msra.mxu0 0.0
    %873 = vmatpush.xpose.msra.mxu0 0.0
    %874 = vmatpush.xpose.msra.mxu0 0.0
    %875 = vmatpush.xpose.msra.mxu0 %v133
    %876 = vmatmul.f32.gmra.mxu0 %v133
    %v877 = vpop.f32.mrf.mxu0
    %v878 = vadd.f32 %v858, %v877
    %879 = vdwg.mxu0
    %880 = vmatpush.xpose.msra.mxu0 0.0
    %881 = vmatpush.xpose.msra.mxu0 0.0
    %882 = vmatpush.xpose.msra.mxu0 0.0
    %883 = vmatpush.xpose.msra.mxu0 0.0
    %884 = vmatpush.xpose.msra.mxu0 0.0
    %885 = vmatpush.xpose.msra.mxu0 0.0
    %886 = vmatpush.xpose.msra.mxu0 0.0
    %887 = vmatpush.xpose.msra.mxu0 0.0
    %888 = vmatpush.xpose.msra.mxu0 0.0
    %889 = vmatpush.xpose.msra.mxu0 0.0
    %890 = vmatpush.xpose.msra.mxu0 0.0
    %891 = vmatpush.xpose.msra.mxu0 0.0
    %892 = vmatpush.xpose.msra.mxu0 0.0
    %893 = vmatpush.xpose.msra.mxu0 0.0
    %894 = vmatpush.xpose.msra.mxu0 0.0
    %895 = vmatpush.xpose.msra.mxu0 %v134
    %896 = vmatmul.f32.gmra.mxu0 %v134
    %v897 = vpop.f32.mrf.mxu0
    %v898 = vadd.f32 %v878, %v897
    %899 = vdwg.mxu0
    %900 = vmatpush.xpose.msra.mxu0 0.0
    %901 = vmatpush.xpose.msra.mxu0 0.0
    %902 = vmatpush.xpose.msra.mxu0 0.0
    %903 = vmatpush.xpose.msra.mxu0 0.0
    %904 = vmatpush.xpose.msra.mxu0 0.0
    %905 = vmatpush.xpose.msra.mxu0 0.0
    %906 = vmatpush.xpose.msra.mxu0 0.0
    %907 = vmatpush.xpose.msra.mxu0 0.0
    %908 = vmatpush.xpose.msra.mxu0 0.0
    %909 = vmatpush.xpose.msra.mxu0 0.0
    %910 = vmatpush.xpose.msra.mxu0 0.0
    %911 = vmatpush.xpose.msra.mxu0 0.0
    %912 = vmatpush.xpose.msra.mxu0 0.0
    %913 = vmatpush.xpose.msra.mxu0 0.0
    %914 = vmatpush.xpose.msra.mxu0 0.0
    %915 = vmatpush.xpose.msra.mxu0 %v135
    %916 = vmatmul.f32.gmra.mxu0 %v135
    %v917 = vpop.f32.mrf.mxu0
    %v918 = vadd.f32 %v898, %v917
    %919 = vdwg.mxu0
    %920 = vmatpush.xpose.msra.mxu0 0.0
    %921 = vmatpush.xpose.msra.mxu0 0.0
    %922 = vmatpush.xpose.msra.mxu0 0.0
    %923 = vmatpush.xpose.msra.mxu0 0.0
    %924 = vmatpush.xpose.msra.mxu0 0.0
    %925 = vmatpush.xpose.msra.mxu0 0.0
    %926 = vmatpush.xpose.msra.mxu0 0.0
    %927 = vmatpush.xpose.msra.mxu0 0.0
    %928 = vmatpush.xpose.msra.mxu0 0.0
    %929 = vmatpush.xpose.msra.mxu0 0.0
    %930 = vmatpush.xpose.msra.mxu0 0.0
    %931 = vmatpush.xpose.msra.mxu0 0.0
    %932 = vmatpush.xpose.msra.mxu0 0.0
    %933 = vmatpush.xpose.msra.mxu0 0.0
    %934 = vmatpush.xpose.msra.mxu0 0.0
    %935 = vmatpush.xpose.msra.mxu0 %v136
    %936 = vmatmul.f32.gmra.mxu0 %v136
    %v937 = vpop.f32.mrf.mxu0
    %v938 = vadd.f32 %v918, %v937
    %939 = vdwg.mxu0
    %v940 = vadd.f32 %v779, %v938
    %vm941 = vcmask 64512
    %942 = vst.msk [vmem:[#allocation2] sm:$0xff] %vm941, %v940
    %v943 = vld [vmem:[#allocation3] sm:$0xff]
    %944 = vmatpush.xpose.msra.mxu0 0.0
    %945 = vmatpush.xpose.msra.mxu0 0.0
    %946 = vmatpush.xpose.msra.mxu0 0.0
    %947 = vmatpush.xpose.msra.mxu0 0.0
    %948 = vmatpush.xpose.msra.mxu0 0.0
    %949 = vmatpush.xpose.msra.mxu0 0.0
    %950 = vmatpush.xpose.msra.mxu0 0.0
    %951 = vmatpush.xpose.msra.mxu0 0.0
    %952 = vmatpush.xpose.msra.mxu0 0.0
    %953 = vmatpush.xpose.msra.mxu0 0.0
    %954 = vmatpush.xpose.msra.mxu0 0.0
    %955 = vmatpush.xpose.msra.mxu0 0.0
    %956 = vmatpush.xpose.msra.mxu0 0.0
    %957 = vmatpush.xpose.msra.mxu0 0.0
    %958 = vmatpush.xpose.msra.mxu0 0.0
    %959 = vmatpush.xpose.msra.mxu0 %v281
    %960 = vmatmul.f32.gmra.mxu0 %v281
    %v961 = vpop.f32.mrf.mxu0
    %v962 = vadd.f32 0.0, %v961
    %963 = vdwg.mxu0
    %964 = vmatpush.xpose.msra.mxu0 0.0
    %965 = vmatpush.xpose.msra.mxu0 0.0
    %966 = vmatpush.xpose.msra.mxu0 0.0
    %967 = vmatpush.xpose.msra.mxu0 0.0
    %968 = vmatpush.xpose.msra.mxu0 0.0
    %969 = vmatpush.xpose.msra.mxu0 0.0
    %970 = vmatpush.xpose.msra.mxu0 0.0
    %971 = vmatpush.xpose.msra.mxu0 0.0
    %972 = vmatpush.xpose.msra.mxu0 0.0
    %973 = vmatpush.xpose.msra.mxu0 0.0
    %974 = vmatpush.xpose.msra.mxu0 0.0
    %975 = vmatpush.xpose.msra.mxu0 0.0
    %976 = vmatpush.xpose.msra.mxu0 0.0
    %977 = vmatpush.xpose.msra.mxu0 0.0
    %978 = vmatpush.xpose.msra.mxu0 0.0
    %979 = vmatpush.xpose.msra.mxu0 %v282
    %980 = vmatmul.f32.gmra.mxu0 %v282
    %v981 = vpop.f32.mrf.mxu0
    %v982 = vadd.f32 %v962, %v981
    %983 = vdwg.mxu0
    %984 = vmatpush.xpose.msra.mxu0 0.0
    %985 = vmatpush.xpose.msra.mxu0 0.0
    %986 = vmatpush.xpose.msra.mxu0 0.0
    %987 = vmatpush.xpose.msra.mxu0 0.0
    %988 = vmatpush.xpose.msra.mxu0 0.0
    %989 = vmatpush.xpose.msra.mxu0 0.0
    %990 = vmatpush.xpose.msra.mxu0 0.0
    %991 = vmatpush.xpose.msra.mxu0 0.0
    %992 = vmatpush.xpose.msra.mxu0 0.0
    %993 = vmatpush.xpose.msra.mxu0 0.0
    %994 = vmatpush.xpose.msra.mxu0 0.0
    %995 = vmatpush.xpose.msra.mxu0 0.0
    %996 = vmatpush.xpose.msra.mxu0 0.0
    %997 = vmatpush.xpose.msra.mxu0 0.0
    %998 = vmatpush.xpose.msra.mxu0 0.0
    %999 = vmatpush.xpose.msra.mxu0 %v283
    %1000 = vmatmul.f32.gmra.mxu0 %v283
    %v1001 = vpop.f32.mrf.mxu0
    %v1002 = vadd.f32 %v982, %v1001
    %1003 = vdwg.mxu0
    %1004 = vmatpush.xpose.msra.mxu0 0.0
    %1005 = vmatpush.xpose.msra.mxu0 0.0
    %1006 = vmatpush.xpose.msra.mxu0 0.0
    %1007 = vmatpush.xpose.msra.mxu0 0.0
    %1008 = vmatpush.xpose.msra.mxu0 0.0
    %1009 = vmatpush.xpose.msra.mxu0 0.0
    %1010 = vmatpush.xpose.msra.mxu0 0.0
    %1011 = vmatpush.xpose.msra.mxu0 0.0
    %1012 = vmatpush.xpose.msra.mxu0 0.0
    %1013 = vmatpush.xpose.msra.mxu0 0.0
    %1014 = vmatpush.xpose.msra.mxu0 0.0
    %1015 = vmatpush.xpose.msra.mxu0 0.0
    %1016 = vmatpush.xpose.msra.mxu0 0.0
    %1017 = vmatpush.xpose.msra.mxu0 0.0
    %1018 = vmatpush.xpose.msra.mxu0 0.0
    %1019 = vmatpush.xpose.msra.mxu0 %v284
    %1020 = vmatmul.f32.gmra.mxu0 %v284
    %v1021 = vpop.f32.mrf.mxu0
    %v1022 = vadd.f32 %v1002, %v1021
    %1023 = vdwg.mxu0
    %1024 = vmatpush.xpose.msra.mxu0 0.0
    %1025 = vmatpush.xpose.msra.mxu0 0.0
    %1026 = vmatpush.xpose.msra.mxu0 0.0
    %1027 = vmatpush.xpose.msra.mxu0 0.0
    %1028 = vmatpush.xpose.msra.mxu0 0.0
    %1029 = vmatpush.xpose.msra.mxu0 0.0
    %1030 = vmatpush.xpose.msra.mxu0 0.0
    %1031 = vmatpush.xpose.msra.mxu0 0.0
    %1032 = vmatpush.xpose.msra.mxu0 0.0
    %1033 = vmatpush.xpose.msra.mxu0 0.0
    %1034 = vmatpush.xpose.msra.mxu0 0.0
    %1035 = vmatpush.xpose.msra.mxu0 0.0
    %1036 = vmatpush.xpose.msra.mxu0 0.0
    %1037 = vmatpush.xpose.msra.mxu0 0.0
    %1038 = vmatpush.xpose.msra.mxu0 0.0
    %1039 = vmatpush.xpose.msra.mxu0 %v285
    %1040 = vmatmul.f32.gmra.mxu0 %v285
    %v1041 = vpop.f32.mrf.mxu0
    %v1042 = vadd.f32 %v1022, %v1041
    %1043 = vdwg.mxu0
    %1044 = vmatpush.xpose.msra.mxu0 0.0
    %1045 = vmatpush.xpose.msra.mxu0 0.0
    %1046 = vmatpush.xpose.msra.mxu0 0.0
    %1047 = vmatpush.xpose.msra.mxu0 0.0
    %1048 = vmatpush.xpose.msra.mxu0 0.0
    %1049 = vmatpush.xpose.msra.mxu0 0.0
    %1050 = vmatpush.xpose.msra.mxu0 0.0
    %1051 = vmatpush.xpose.msra.mxu0 0.0
    %1052 = vmatpush.xpose.msra.mxu0 0.0
    %1053 = vmatpush.xpose.msra.mxu0 0.0
    %1054 = vmatpush.xpose.msra.mxu0 0.0
    %1055 = vmatpush.xpose.msra.mxu0 0.0
    %1056 = vmatpush.xpose.msra.mxu0 0.0
    %1057 = vmatpush.xpose.msra.mxu0 0.0
    %1058 = vmatpush.xpose.msra.mxu0 0.0
    %1059 = vmatpush.xpose.msra.mxu0 %v286
    %1060 = vmatmul.f32.gmra.mxu0 %v286
    %v1061 = vpop.f32.mrf.mxu0
    %v1062 = vadd.f32 %v1042, %v1061
    %1063 = vdwg.mxu0
    %1064 = vmatpush.xpose.msra.mxu0 0.0
    %1065 = vmatpush.xpose.msra.mxu0 0.0
    %1066 = vmatpush.xpose.msra.mxu0 0.0
    %1067 = vmatpush.xpose.msra.mxu0 0.0
    %1068 = vmatpush.xpose.msra.mxu0 0.0
    %1069 = vmatpush.xpose.msra.mxu0 0.0
    %1070 = vmatpush.xpose.msra.mxu0 0.0
    %1071 = vmatpush.xpose.msra.mxu0 0.0
    %1072 = vmatpush.xpose.msra.mxu0 0.0
    %1073 = vmatpush.xpose.msra.mxu0 0.0
    %1074 = vmatpush.xpose.msra.mxu0 0.0
    %1075 = vmatpush.xpose.msra.mxu0 0.0
    %1076 = vmatpush.xpose.msra.mxu0 0.0
    %1077 = vmatpush.xpose.msra.mxu0 0.0
    %1078 = vmatpush.xpose.msra.mxu0 0.0
    %1079 = vmatpush.xpose.msra.mxu0 %v287
    %1080 = vmatmul.f32.gmra.mxu0 %v287
    %v1081 = vpop.f32.mrf.mxu0
    %v1082 = vadd.f32 %v1062, %v1081
    %1083 = vdwg.mxu0
    %1084 = vmatpush.xpose.msra.mxu0 0.0
    %1085 = vmatpush.xpose.msra.mxu0 0.0
    %1086 = vmatpush.xpose.msra.mxu0 0.0
    %1087 = vmatpush.xpose.msra.mxu0 0.0
    %1088 = vmatpush.xpose.msra.mxu0 0.0
    %1089 = vmatpush.xpose.msra.mxu0 0.0
    %1090 = vmatpush.xpose.msra.mxu0 0.0
    %1091 = vmatpush.xpose.msra.mxu0 0.0
    %1092 = vmatpush.xpose.msra.mxu0 0.0
    %1093 = vmatpush.xpose.msra.mxu0 0.0
    %1094 = vmatpush.xpose.msra.mxu0 0.0
    %1095 = vmatpush.xpose.msra.mxu0 0.0
    %1096 = vmatpush.xpose.msra.mxu0 0.0
    %1097 = vmatpush.xpose.msra.mxu0 0.0
    %1098 = vmatpush.xpose.msra.mxu0 0.0
    %1099 = vmatpush.xpose.msra.mxu0 %v288
    %1100 = vmatmul.f32.gmra.mxu0 %v288
    %v1101 = vpop.f32.mrf.mxu0
    %v1102 = vadd.f32 %v1082, %v1101
    %1103 = vdwg.mxu0
    %v1104 = vadd.f32 %v943, %v1102
    %1105 = vst.msk [vmem:[#allocation3] sm:$0xff] %vm941, %v1104
    // Predicated region
    $region22: #{tpu_custom_call.1} parent=1 // pred_check
      %p1106 = pneg %p40
    $region23: #{tpu_custom_call.1} parent=1 // pred_check_branch
      %1108 = sbr.rel (%p1106) target = $region25
    $region24: #{tpu_custom_call.1} parent=1 // pred_region
      %v1109 = vld [vmem:[#allocation4] sm:$0x1]
      %s1110 = vtos %v1109
      %v1111 = vld [vmem:[#allocation5] sm:$0x1]
      %s1112 = vtos %v1111
      %s1113 = sadd.f32 %s1110, %s1112
      %s1114 = smul.f32 %s1113, 0.00048828125
      %v1115 = vld [vmem:[#allocation2] sm:$0xff]
      %v1116 = vld [vmem:[#allocation3] sm:$0xff]
      %v1117 = vmul.f32 %v1115, %v1116
      %v1118 = vsel %vm941, %v1117, 0.0
      %1119 = vadd.xlane.f32.xlu0 %v1118
      %v1120 = vpop.xlane.xlu0 %1119
      %v1121 = vrot.slane %v1120, 4
      %v1122 = vadd.f32 %v1120, %v1121
      %v1123 = vrot.slane %v1122, 2
      %v1124 = vadd.f32 %v1122, %v1123
      %v1125 = vrot.slane %v1124, 1
      %v1126 = vadd.f32 %v1124, %v1125
      %s1127 = vtos %v1126
      %s1128 = smul.f32 %s1127, 1.9929847e-05
      %s1129 = smul.f32 %s1114, 0.5
      %s1130 = smul.f32 %s1128, 0.5
      %s1131 = sadd.f32 %s1129, %s1130
      %s1132 = scalar_lea.smem [#allocation11], 0
      %1133 = sst [smem:[%s1132]] %s1131
    $region25: #{tpu_custom_call.1} parent=1 // pred_fallthru
      _
    // Predicated region
    $region26: #{tpu_custom_call.1} parent=1 // pred_check
      _
    $region27: #{tpu_custom_call.1} parent=1 // pred_check_branch
      %1135 = sbr.rel (0) target = $region29
    $region28: #{tpu_custom_call.1} parent=1 // pred_region
      %1137 = vsyncadd [#allocation8], 0
      %s1139 = sshll.u32 %s2, 4
      %s1140 = int_to_ptr.hbm [resolvable:$true] %s1139
      %1142 = dma.smem_to_hbm [#allocation11], 16, %s1140, [#allocation8]
    $region29: #{tpu_custom_call.1} parent=1 // pred_fallthru
      _
    // Predicated region
    $region30: #{tpu_custom_call.1} parent=1 // pred_check
      _
    $region31: #{tpu_custom_call.1} parent=1 // pred_check_branch
      %1144 = sbr.rel (0) target = $region33
    $region32: #{tpu_custom_call.1} parent=1 // pred_region
      %1146 = dma.done [#allocation8], 16
    $region33: #{tpu_custom_call.1} parent=1 // pred_fallthru
      _
    %1147 = sfence
    %1148 = vsyncpa [#allocation7], 1
    %1149 = vsyncpa [#allocation10], 1
    %1150 = vsyncpa [#allocation8], 1

</llo_original>
